<compile_context>
chip_gen: v7x
topology: tpu7x:2x2x1
jax: 0.10.0
libtpu: 0.0.40
codegen_flags: <defaults>
</compile_context>

<pallas_src>
import jax
import jax.numpy as jnp
from jax.experimental import pallas as pl
from jax.experimental.pallas import tpu as pltpu


def _round_up(x, m):
    return ((x + m - 1) // m) * m


def mixed_layer_all_kernel(xb_ref, x_ref, pw_sq_ref, wt_ref, bias_ref, out_ref):
    # bounded part: x_bounded @ (pos_weights**2)   (weight pre-squared in wrapper, MXU)
    acc = jnp.dot(xb_ref[...], pw_sq_ref[...], preferred_element_type=jnp.float32)
    # nn_node linear part: X @ W^T   (weight pre-transposed to (d_in, d_out), MXU)
    acc = acc + jnp.dot(x_ref[...], wt_ref[...], preferred_element_type=jnp.float32)
    # folded bias (pos_bias + w_bias) + transformation f = tanh (EUP), one store per tile.
    # NOTE: d_out=64 output tile is half a lane row (masked stores); acceptable since the
    # kernel is HBM-bound, not store-slot bound.
    out_ref[...] = jnp.tanh(acc + bias_ref[...]).astype(out_ref.dtype)


def mixed_layer_all_forward(X, x_cat, x_bounded, pos_weights, pos_bias, w_weight, w_bias,
                            *, tb_max=512, compute_dtype=None,
                            min_pallas_batch=256, force_pallas=False):
    """Forward pass of mixed_layer_all (cat_size_list=[], dropout p=0.0 case).

    X:           (B, d_in)            regular features
    x_cat:       must be an empty list/tuple
    x_bounded:   (B, d_in_bounded)    bounded features
    pos_weights: (d_in_bounded, d_out)
    pos_bias:    (d_out,)
    w_weight:    (d_out, d_in)        PyTorch nn.Linear weight layout (out, in)
    w_bias:      (d_out,)
    Returns:     (B, d_out) float32
    """
    assert isinstance(x_cat, (list, tuple)) and len(x_cat) == 0, "x_cat path not supported"

    B, d_in = X.shape
    d_in_bounded, d_out = pos_weights.shape
    assert x_bounded.shape == (B, d_in_bounded)
    assert w_weight.shape == (d_out, d_in)
    assert pos_bias.shape == (d_out,) and w_bias.shape == (d_out,)

    # --- grid-constant parameter transforms, done ONCE in the wrapper -----------------
    pw_sq = (pos_weights * pos_weights).astype(jnp.float32)     # bounding_op(pos_weights)
    w_t = jnp.transpose(w_weight).astype(jnp.float32)            # (d_in, d_out)
    bias = (pos_bias + w_bias).reshape(1, d_out).astype(jnp.float32)

    if compute_dtype is not None:
        # Optional bandwidth optimization (e.g. jnp.bfloat16). Accumulation stays f32.
        X = X.astype(compute_dtype)
        x_bounded = x_bounded.astype(compute_dtype)
        pw_sq = pw_sq.astype(compute_dtype)
        w_t = w_t.astype(compute_dtype)

    # --- tiny-batch fallback: pallas_call launch overhead dominates, just use XLA -----
    if (not force_pallas) and B < min_pallas_batch:
        acc = jnp.dot(x_bounded, pw_sq, preferred_element_type=jnp.float32)
        acc = acc + jnp.dot(X, w_t, preferred_element_type=jnp.float32)
        return jnp.tanh(acc + bias)

    in_itemsize = jnp.dtype(X.dtype).itemsize

    # --- batch tile selection ----------------------------------------------------------
    # Multiple of 128 (fills the MXU M dim, satisfies (8,128) sublane rule), capped at
    # tb_max, and sized so the grid has >= 2 steps when B allows (pipelining + v7x's
    # two TensorCores via dimension_semantics=("parallel",)).
    if B <= 128:
        TB = B  # full-array block is always legal
    else:
        tb_cap = max(128, (min(int(tb_max), B) // 128) * 128)
        TB = min(tb_cap, _round_up(pl.cdiv(B, 2), 128))

    # --- VMEM budget (double-buffered streams + single-buffered resident weights) ------
    def _budget(tb):
        stream = 2 * tb * (d_in + d_in_bounded) * in_itemsize + 2 * tb * d_out * 4
        resident = (pw_sq.size + w_t.size) * in_itemsize + d_out * 4
        return stream + resident

    while TB > 128 and _budget(TB) > (24 << 20):   # conservative across v5e/v6e/v7x
        TB = max(128, _round_up(TB // 2, 128))

    vmem_limit = int(min(64 << 20, max(32 << 20, 2 * _budget(TB))))

    grid = (pl.cdiv(B, TB),)
    vmem = pltpu.MemorySpace.VMEM

    cost = pl.CostEstimate(
        flops=2 * B * (d_in + d_in_bounded) * d_out,
        transcendentals=B * d_out,
        bytes_accessed=(X.size + x_bounded.size + pw_sq.size + w_t.size) * in_itemsize
                       + 4 * (d_out + B * d_out),
    )

    return pl.pallas_call(
        mixed_layer_all_kernel,
        out_shape=jax.ShapeDtypeStruct((B, d_out), jnp.float32),
        grid=grid,
        in_specs=[
            # Batch-tiled operands: streamed over the grid (double-buffered DMA).
            pl.BlockSpec((TB, d_in_bounded), lambda i: (i, 0), memory_space=vmem),
            pl.BlockSpec((TB, d_in), lambda i: (i, 0), memory_space=vmem),
            # Grid-constant weights / bias: constant index map, single-buffered (no
            # wasted second VMEM copy for blocks whose index never changes).
            pl.BlockSpec((d_in_bounded, d_out), lambda i: (0, 0), memory_space=vmem,
                         pipeline_mode=pl.Buffered(1)),
            pl.BlockSpec((d_in, d_out), lambda i: (0, 0), memory_space=vmem,
                         pipeline_mode=pl.Buffered(1)),
            pl.BlockSpec((1, d_out), lambda i: (0, 0), memory_space=vmem,
                         pipeline_mode=pl.Buffered(1)),
        ],
        out_specs=pl.BlockSpec((TB, d_out), lambda i: (i, 0), memory_space=vmem),
        compiler_params=pltpu.CompilerParams(
            dimension_semantics=("parallel",),
            vmem_limit_bytes=vmem_limit,
        ),
        cost_estimate=cost,
    )(x_bounded, X, pw_sq, w_t, bias)


if __name__ == "__main__":
    # Shapes consistent with the module: d_in=32, d_in_bounded=16, d_out=64.
    d_in, d_in_bounded, d_out = 32, 16, 64

    key = jax.random.PRNGKey(0)
    k1, k2, k3, k4, k5, k6, k7, k8 = jax.random.split(key, 8)

    # Parameters (torch.randn-like), f32.
    pos_weights = jax.random.normal(k1, (d_in_bounded, d_out), dtype=jnp.float32)
    pos_bias = jax.random.normal(k2, (d_out,), dtype=jnp.float32)
    w_weight = jax.random.normal(k3, (d_out, d_in), dtype=jnp.float32) * 0.1  # (out, in)
    w_bias = jax.random.normal(k4, (d_out,), dtype=jnp.float32) * 0.1

    def ref_fn(X, x_bounded):
        # Pure-JAX reference with the same semantics as the PyTorch forward
        # (bounding_op = square, nn_node transformation = identity, dropout p=0.0).
        return jnp.tanh(x_bounded @ (pos_weights ** 2) + pos_bias
                        + (X @ w_weight.T + w_bias))

    # Test 1: tiny batch, forced through the Pallas kernel (single-step grid).
    B1 = 8
    X1 = jax.random.normal(k5, (B1, d_in), dtype=jnp.float32)
    xb1 = jax.random.normal(k6, (B1, d_in_bounded), dtype=jnp.float32)
    out1 = mixed_layer_all_forward(X1, [], xb1, pos_weights, pos_bias, w_weight, w_bias,
                                   force_pallas=True)
    out1 = jax.block_until_ready(out1)
    assert out1.shape == (B1, d_out)
    assert jnp.allclose(out1, ref_fn(X1, xb1), atol=1e-5, rtol=1e-5), "mismatch (B=8)"

    # Test 2: moderate batch -> multi-step grid (TB=256, 2 steps, ragged last tile),
    # exercising the pipelined / megacore-sharded path.
    B2 = 384
    X2 = jax.random.normal(k7, (B2, d_in), dtype=jnp.float32)
    xb2 = jax.random.normal(k8, (B2, d_in_bounded), dtype=jnp.float32)
    out2 = mixed_layer_all_forward(X2, [], xb2, pos_weights, pos_bias, w_weight, w_bias)
    out2 = jax.block_until_ready(out2)
    assert out2.shape == (B2, d_out)
    assert jnp.allclose(out2, ref_fn(X2, xb2), atol=1e-5, rtol=1e-5), "mismatch (B=384)"

    print("KERNEL_OK")
</pallas_src>

<mosaic_0001>
module attributes {stable_mosaic.version = 11 : i64} {
  func.func @mixed_layer_all_kernel(%arg0: i32, %arg1: memref<8x16xf32, #tpu.memory_space<vmem>>, %arg2: memref<8x32xf32, #tpu.memory_space<vmem>>, %arg3: memref<16x64xf32, #tpu.memory_space<vmem>>, %arg4: memref<32x64xf32, #tpu.memory_space<vmem>>, %arg5: memref<1x64xf32, #tpu.memory_space<vmem>>, %arg6: memref<8x64xf32, #tpu.memory_space<vmem>>) attributes {dimension_semantics = [#tpu.dimension_semantics<parallel>], iteration_bounds = array<i64: 1>, scalar_prefetch = 0 : i64, scratch_operands = 0 : i64, tpu.core_type = #tpu.core_type<tc>, window_params = [{transform_indices = @transform_0, window_bounds = array<i64: 8, 16>}, {transform_indices = @transform_1, window_bounds = array<i64: 8, 32>}, {pipeline_mode = #tpu.pipeline_mode<synchronous>, transform_indices = @transform_2, window_bounds = array<i64: 16, 64>}, {pipeline_mode = #tpu.pipeline_mode<synchronous>, transform_indices = @transform_3, window_bounds = array<i64: 32, 64>}, {pipeline_mode = #tpu.pipeline_mode<synchronous>, transform_indices = @transform_4, window_bounds = array<i64: 1, 64>}, {transform_indices = @transform_5, window_bounds = array<i64: 8, 64>}]} {
    %c0 = arith.constant 0 : index
    %c0_0 = arith.constant 0 : index
    %0 = vector.load %arg1[%c0, %c0_0] : memref<8x16xf32, #tpu.memory_space<vmem>>, vector<8x16xf32>
    %c0_1 = arith.constant 0 : index
    %c0_2 = arith.constant 0 : index
    %1 = vector.load %arg3[%c0_1, %c0_2] : memref<16x64xf32, #tpu.memory_space<vmem>>, vector<16x64xf32>
    %cst = arith.constant dense<0.000000e+00> : vector<8x64xf32>
    %2 = tpu.matmul %0, %1, %cst {dimension_numbers = #tpu.dot_dimension_numbers<[1], [0], [0], [1], [0, 0, 1, 1], [], []>} : vector<8x16xf32>, vector<16x64xf32>, vector<8x64xf32> -> vector<8x64xf32>
    %c0_3 = arith.constant 0 : index
    %c0_4 = arith.constant 0 : index
    %3 = vector.load %arg2[%c0_3, %c0_4] : memref<8x32xf32, #tpu.memory_space<vmem>>, vector<8x32xf32>
    %c0_5 = arith.constant 0 : index
    %c0_6 = arith.constant 0 : index
    %4 = vector.load %arg4[%c0_5, %c0_6] : memref<32x64xf32, #tpu.memory_space<vmem>>, vector<32x64xf32>
    %cst_7 = arith.constant dense<0.000000e+00> : vector<8x64xf32>
    %5 = tpu.matmul %3, %4, %cst_7 {dimension_numbers = #tpu.dot_dimension_numbers<[1], [0], [0], [1], [0, 0, 1, 1], [], []>} : vector<8x32xf32>, vector<32x64xf32>, vector<8x64xf32> -> vector<8x64xf32>
    %6 = arith.addf %2, %5 : vector<8x64xf32>
    %c0_8 = arith.constant 0 : index
    %c0_9 = arith.constant 0 : index
    %7 = vector.load %arg5[%c0_8, %c0_9] : memref<1x64xf32, #tpu.memory_space<vmem>>, vector<1x64xf32>
    %8 = vector.broadcast %7 : vector<1x64xf32> to vector<8x64xf32>
    %9 = arith.addf %6, %8 : vector<8x64xf32>
    %10 = math.tanh %9 : vector<8x64xf32>
    %c0_10 = arith.constant 0 : index
    %c0_11 = arith.constant 0 : index
    %11 = vector.load %arg6[%c0_10, %c0_11] : memref<8x64xf32, #tpu.memory_space<vmem>>, vector<8x64xf32>
    tpu.vector_store %arg6[%c0_10, %c0_11], %10 {strides = array<i32>} : memref<8x64xf32, #tpu.memory_space<vmem>>, vector<8x64xf32>,
    return
  }
  func.func @transform_0(%arg0: i32) -> (i32, i32) {
    %c0_i32 = arith.constant 0 : i32
    %c0_i32_0 = arith.constant 0 : i32
    return %arg0, %c0_i32 : i32, i32
  }
  func.func @transform_1(%arg0: i32) -> (i32, i32) {
    %c0_i32 = arith.constant 0 : i32
    %c0_i32_0 = arith.constant 0 : i32
    return %arg0, %c0_i32 : i32, i32
  }
  func.func @transform_2(%arg0: i32) -> (i32, i32) {
    %c0_i32 = arith.constant 0 : i32
    %c0_i32_0 = arith.constant 0 : i32
    %c0_i32_1 = arith.constant 0 : i32
    return %c0_i32, %c0_i32_0 : i32, i32
  }
  func.func @transform_3(%arg0: i32) -> (i32, i32) {
    %c0_i32 = arith.constant 0 : i32
    %c0_i32_0 = arith.constant 0 : i32
    %c0_i32_1 = arith.constant 0 : i32
    return %c0_i32, %c0_i32_0 : i32, i32
  }
  func.func @transform_4(%arg0: i32) -> (i32, i32) {
    %c0_i32 = arith.constant 0 : i32
    %c0_i32_0 = arith.constant 0 : i32
    %c0_i32_1 = arith.constant 0 : i32
    return %c0_i32, %c0_i32_0 : i32, i32
  }
  func.func @transform_5(%arg0: i32) -> (i32, i32) {
    %c0_i32 = arith.constant 0 : i32
    %c0_i32_0 = arith.constant 0 : i32
    return %arg0, %c0_i32 : i32, i32
  }
}

</mosaic_0001>

<llo_original>
// kernel: tpu_custom_call.1
$region0: #{tpu_custom_call.1}
  #allocation0 [shape = 'u32[]', space=smem, size = 0x4, offset = 0x4, fixed_abs, tag = 'smem constant byte address 0x4 - core index']
  #allocation1 [shape = 'u32[144,128]{1,0:T(1,128)}', space=vmem, size = 0x12000, scoped, tag = 'internal scratch']
  %s0 = inlined_call_operand.hbm [shape: f32[8,16], index: 0, kind: input, shape index: {}]
  %s1 = inlined_call_operand.hbm [shape: f32[8,32], index: 1, kind: input, shape index: {}]
  %s2 = inlined_call_operand.hbm [shape: f32[16,64], index: 2, kind: input, shape index: {}]
  %s3 = inlined_call_operand.hbm [shape: f32[32,64], index: 3, kind: input, shape index: {}]
  %s4 = inlined_call_operand.vmem [shape: f32[1,64], index: 4, kind: input, shape index: {}]
  %s5 = inlined_call_operand.hbm [shape: f32[8,64], index: 5, kind: output, shape index: {}]
  %s6 = sld [smem:[#allocation0]]
  $region46: #{tpu_custom_call.1} parent=0
    _
  %s8 = ssub.s32 1, %s6
  %s9 = scalar_select 0, %s8, %s6
  $region1: #{tpu_custom_call.1} parent=0
    #allocation2 [shape = 'u8[4096]{0}', space=vmem, size = 0x1000, scoped, tag = 'input window, operand 0, single buffered']
    #allocation3 [shape = 's32[1]{0}', space=sflag, size = 0x4, scoped, tag = 'scoped memory for tpu_custom_call.1']
    #allocation4 [shape = 's32[1]{0}', space=sflag, size = 0x4, scoped, tag = 'scoped memory for tpu_custom_call.1']
    #allocation5 [shape = 'u8[4096]{0}', space=vmem, size = 0x1000, scoped, tag = 'input window, operand 1, single buffered']
    #allocation6 [shape = 's32[1]{0}', space=sflag, size = 0x4, scoped, tag = 'scoped memory for tpu_custom_call.1']
    #allocation7 [shape = 'u8[8192]{0}', space=vmem, size = 0x2000, scoped, tag = 'input window, operand 2, single buffered']
    #allocation8 [shape = 'u8[16384]{0}', space=vmem, size = 0x4000, scoped, tag = 'input window, operand 3, single buffered']
    #allocation9 [shape = 's32[1]{0}', space=sflag, size = 0x4, scoped, tag = 'scoped memory for tpu_custom_call.1']
    #allocation10 [shape = 'u8[4096]{0}', space=vmem, size = 0x1000, scoped, tag = 'output window, operand 0, single buffered']
    %10 = vsyncpa [#allocation3], 0
    %11 = vsyncpa [#allocation6], 0
    %12 = vsyncpa [#allocation9], 0
    %13 = vsyncpa [#allocation4], 0
    // Predicated region
    $region2: #{tpu_custom_call.1} parent=1 // pred_check
      _
    $region3: #{tpu_custom_call.1} parent=1 // pred_check_branch
      %15 = sbr.rel (0) target = $region5
    $region4: #{tpu_custom_call.1} parent=1 // pred_region
      %s17 = ssub.s32 128, 128
      %18 = vsyncadd [#allocation3], %s17
      %s20 = sshll.u32 [#allocation2], 4
      %s21 = int_to_ptr.vmem [resolvable:$true] %s20
      %23 = dma.hbm_to_vmem [thread:$0]  %s0, 128, %s21, [#allocation3]
    $region5: #{tpu_custom_call.1} parent=1 // pred_fallthru
      _
    // Predicated region
    $region6: #{tpu_custom_call.1} parent=1 // pred_check
      _
    $region7: #{tpu_custom_call.1} parent=1 // pred_check_branch
      %25 = sbr.rel (0) target = $region9
    $region8: #{tpu_custom_call.1} parent=1 // pred_region
      %s27 = ssub.s32 128, 128
      %28 = vsyncadd [#allocation6], %s27
      %s30 = sshll.u32 [#allocation5], 4
      %s31 = int_to_ptr.vmem [resolvable:$true] %s30
      %33 = dma.hbm_to_vmem [thread:$0]  %s1, 128, %s31, [#allocation6]
    $region9: #{tpu_custom_call.1} parent=1 // pred_fallthru
      _
    // Predicated region
    $region10: #{tpu_custom_call.1} parent=1 // pred_check
      _
    $region11: #{tpu_custom_call.1} parent=1 // pred_check_branch
      %35 = sbr.rel (0) target = $region13
    $region12: #{tpu_custom_call.1} parent=1 // pred_region
      %s37 = ssub.s32 256, 256
      %38 = vsyncadd [#allocation6], %s37
      %s39 = sshll.u32 [#allocation7], 4
      %s40 = int_to_ptr.vmem [resolvable:$true] %s39
      %45 = dma.hbm_to_vmem [thread:$0]  %s2, 256, %s40, [#allocation6], 128, 128, 8
    $region13: #{tpu_custom_call.1} parent=1 // pred_fallthru
      _
    // Predicated region
    $region14: #{tpu_custom_call.1} parent=1 // pred_check
      _
    $region15: #{tpu_custom_call.1} parent=1 // pred_check_branch
      %47 = sbr.rel (0) target = $region17
    $region16: #{tpu_custom_call.1} parent=1 // pred_region
      %s49 = ssub.s32 512, 512
      %50 = vsyncadd [#allocation9], %s49
      %s51 = sshll.u32 [#allocation8], 4
      %s52 = int_to_ptr.vmem [resolvable:$true] %s51
      %57 = dma.hbm_to_vmem [thread:$0]  %s3, 512, %s52, [#allocation9], 128, 128, 8
    $region17: #{tpu_custom_call.1} parent=1 // pred_fallthru
      _
    // Predicated region
    $region18: #{tpu_custom_call.1} parent=1 // pred_check
      _
    $region19: #{tpu_custom_call.1} parent=1 // pred_check_branch
      %59 = sbr.rel (0) target = $region21
    $region20: #{tpu_custom_call.1} parent=1 // pred_region
      _
    $region21: #{tpu_custom_call.1} parent=1 // pred_fallthru
      _
    // Predicated region
    $region22: #{tpu_custom_call.1} parent=1 // pred_check
      _
    $region23: #{tpu_custom_call.1} parent=1 // pred_check_branch
      %61 = sbr.rel (0) target = $region25
    $region24: #{tpu_custom_call.1} parent=1 // pred_region
      %62 = dma.done [#allocation3], 128
    $region25: #{tpu_custom_call.1} parent=1 // pred_fallthru
      _
    // Predicated region
    $region26: #{tpu_custom_call.1} parent=1 // pred_check
      _
    $region27: #{tpu_custom_call.1} parent=1 // pred_check_branch
      %64 = sbr.rel (0) target = $region29
    $region28: #{tpu_custom_call.1} parent=1 // pred_region
      %65 = dma.done [#allocation6], 128
    $region29: #{tpu_custom_call.1} parent=1 // pred_fallthru
      _
    // Predicated region
    $region30: #{tpu_custom_call.1} parent=1 // pred_check
      _
    $region31: #{tpu_custom_call.1} parent=1 // pred_check_branch
      %67 = sbr.rel (0) target = $region33
    $region32: #{tpu_custom_call.1} parent=1 // pred_region
      %68 = dma.done [#allocation6], 256
    $region33: #{tpu_custom_call.1} parent=1 // pred_fallthru
      _
    // Predicated region
    $region34: #{tpu_custom_call.1} parent=1 // pred_check
      _
    $region35: #{tpu_custom_call.1} parent=1 // pred_check_branch
      %70 = sbr.rel (0) target = $region37
    $region36: #{tpu_custom_call.1} parent=1 // pred_region
      %71 = dma.done [#allocation9], 512
    $region37: #{tpu_custom_call.1} parent=1 // pred_fallthru
      _
    %v72 = vld [vmem:[#allocation2] sm:$0xff]
    %v73 = vld [vmem:[#allocation7] sm:$0xff]
    %v74 = vld [vmem:[#allocation7 + $0x8] sm:$0xff]
    %v75 = vld [vmem:[#allocation5] sm:$0xff]
    %v76 = vld [vmem:[#allocation8] sm:$0xff]
    %v77 = vld [vmem:[#allocation8 + $0x8] sm:$0xff]
    %v78 = vld [vmem:[#allocation8 + $0x10] sm:$0xff]
    %v79 = vld [vmem:[#allocation8 + $0x18] sm:$0xff]
    %vm80 = vcmask 261120
    %v82 = vsel %vm80, %v75, 0
    %84 = vmatprep.subr.mxu0 0.0
    %85 = vmatpush1.msra.mxu0 %v76
    %86 = vmatprep.subr.mxu0 0.0
    %87 = vmatpush1.msra.mxu0 %v77
    %88 = vmatprep.subr.mxu0 0.0
    %89 = vmatpush1.msra.mxu0 %v78
    %90 = vmatprep.subr.mxu0 0.0
    %91 = vmatpush1.msra.mxu0 %v79
    %92 = vmatprep.subr.mxu0 0.0
    %93 = vmatpush1.msra.mxu0 0.0
    %94 = vmatprep.subr.mxu0 0.0
    %95 = vmatpush1.msra.mxu0 0.0
    %96 = vmatprep.subr.mxu0 0.0
    %97 = vmatpush1.msra.mxu0 0.0
    %98 = vmatprep.subr.mxu0 0.0
    %99 = vmatpush1.msra.mxu0 0.0
    %100 = vmatprep.subr.mxu0 0.0
    %101 = vmatpush1.msra.mxu0 0.0
    %102 = vmatprep.subr.mxu0 0.0
    %103 = vmatpush1.msra.mxu0 0.0
    %104 = vmatprep.subr.mxu0 0.0
    %105 = vmatpush1.msra.mxu0 0.0
    %106 = vmatprep.subr.mxu0 0.0
    %107 = vmatpush1.msra.mxu0 0.0
    %108 = vmatprep.subr.mxu0 0.0
    %109 = vmatpush1.msra.mxu0 0.0
    %110 = vmatprep.subr.mxu0 0.0
    %111 = vmatpush1.msra.mxu0 0.0
    %112 = vmatprep.subr.mxu0 0.0
    %113 = vmatpush1.msra.mxu0 0.0
    %114 = vmatprep.subr.mxu0 0.0
    %115 = vmatpush1.msra.mxu0 0.0
    %116 = vmatprep.subr.mxu0 0.0
    %117 = vmatpush1.msra.mxu0 0.0
    %118 = vmatprep.subr.mxu0 0.0
    %119 = vmatpush1.msra.mxu0 0.0
    %120 = vmatprep.subr.mxu0 0.0
    %121 = vmatpush1.msra.mxu0 0.0
    %122 = vmatprep.subr.mxu0 0.0
    %123 = vmatpush1.msra.mxu0 0.0
    %124 = vmatprep.subr.mxu0 0.0
    %125 = vmatpush1.msra.mxu0 0.0
    %126 = vmatprep.subr.mxu0 0.0
    %127 = vmatpush1.msra.mxu0 0.0
    %128 = vmatprep.subr.mxu0 0.0
    %129 = vmatpush1.msra.mxu0 0.0
    %130 = vmatprep.subr.mxu0 0.0
    %131 = vmatpush1.msra.mxu0 0.0
    %132 = vmatprep.subr.mxu0 0.0
    %133 = vmatpush1.msra.mxu0 0.0
    %134 = vmatprep.subr.mxu0 0.0
    %135 = vmatpush1.msra.mxu0 0.0
    %136 = vmatprep.subr.mxu0 0.0
    %137 = vmatpush1.msra.mxu0 0.0
    %138 = vmatprep.subr.mxu0 0.0
    %139 = vmatpush1.msra.mxu0 0.0
    %140 = vmatprep.subr.mxu0 0.0
    %141 = vmatpush1.msra.mxu0 0.0
    %142 = vmatprep.subr.mxu0 0.0
    %143 = vmatpush1.msra.mxu0 0.0
    %144 = vmatprep.subr.mxu0 0.0
    %145 = vmatpush1.msra.mxu0 0.0
    %146 = vmatprep.subr.mxu0 0.0
    %147 = vmatpush1.msra.mxu0 0.0
    %148 = vmatprep.mubr.f32.mxu0 0.0
    %149 = vmatmul.mubr.f32.gmra.mrb[0].mxu0 %v82
    %v150 = vpop.f32.mrb[0].mxu0
    %v151 = vadd.f32 0.0, %v150
    %v152 = vpop.f32.mrb[0].mxu0
    %153 = vdwg.mxu0
    %vm154 = vcmask 130048
    %v156 = vsel %vm154, %v72, 0
    %158 = vmatprep.subr.mxu0 0.0
    %159 = vmatpush1.msra.mxu0 %v73
    %160 = vmatprep.subr.mxu0 0.0
    %161 = vmatpush1.msra.mxu0 %v74
    %162 = vmatprep.subr.mxu0 0.0
    %163 = vmatpush1.msra.mxu0 0.0
    %164 = vmatprep.subr.mxu0 0.0
    %165 = vmatpush1.msra.mxu0 0.0
    %166 = vmatprep.subr.mxu0 0.0
    %167 = vmatpush1.msra.mxu0 0.0
    %168 = vmatprep.subr.mxu0 0.0
    %169 = vmatpush1.msra.mxu0 0.0
    %170 = vmatprep.subr.mxu0 0.0
    %171 = vmatpush1.msra.mxu0 0.0
    %172 = vmatprep.subr.mxu0 0.0
    %173 = vmatpush1.msra.mxu0 0.0
    %174 = vmatprep.subr.mxu0 0.0
    %175 = vmatpush1.msra.mxu0 0.0
    %176 = vmatprep.subr.mxu0 0.0
    %177 = vmatpush1.msra.mxu0 0.0
    %178 = vmatprep.subr.mxu0 0.0
    %179 = vmatpush1.msra.mxu0 0.0
    %180 = vmatprep.subr.mxu0 0.0
    %181 = vmatpush1.msra.mxu0 0.0
    %182 = vmatprep.subr.mxu0 0.0
    %183 = vmatpush1.msra.mxu0 0.0
    %184 = vmatprep.subr.mxu0 0.0
    %185 = vmatpush1.msra.mxu0 0.0
    %186 = vmatprep.subr.mxu0 0.0
    %187 = vmatpush1.msra.mxu0 0.0
    %188 = vmatprep.subr.mxu0 0.0
    %189 = vmatpush1.msra.mxu0 0.0
    %190 = vmatprep.subr.mxu0 0.0
    %191 = vmatpush1.msra.mxu0 0.0
    %192 = vmatprep.subr.mxu0 0.0
    %193 = vmatpush1.msra.mxu0 0.0
    %194 = vmatprep.subr.mxu0 0.0
    %195 = vmatpush1.msra.mxu0 0.0
    %196 = vmatprep.subr.mxu0 0.0
    %197 = vmatpush1.msra.mxu0 0.0
    %198 = vmatprep.subr.mxu0 0.0
    %199 = vmatpush1.msra.mxu0 0.0
    %200 = vmatprep.subr.mxu0 0.0
    %201 = vmatpush1.msra.mxu0 0.0
    %202 = vmatprep.subr.mxu0 0.0
    %203 = vmatpush1.msra.mxu0 0.0
    %204 = vmatprep.subr.mxu0 0.0
    %205 = vmatpush1.msra.mxu0 0.0
    %206 = vmatprep.subr.mxu0 0.0
    %207 = vmatpush1.msra.mxu0 0.0
    %208 = vmatprep.subr.mxu0 0.0
    %209 = vmatpush1.msra.mxu0 0.0
    %210 = vmatprep.subr.mxu0 0.0
    %211 = vmatpush1.msra.mxu0 0.0
    %212 = vmatprep.subr.mxu0 0.0
    %213 = vmatpush1.msra.mxu0 0.0
    %214 = vmatprep.subr.mxu0 0.0
    %215 = vmatpush1.msra.mxu0 0.0
    %216 = vmatprep.subr.mxu0 0.0
    %217 = vmatpush1.msra.mxu0 0.0
    %218 = vmatprep.subr.mxu0 0.0
    %219 = vmatpush1.msra.mxu0 0.0
    %220 = vmatprep.subr.mxu0 0.0
    %221 = vmatpush1.msra.mxu0 0.0
    %222 = vmatprep.mubr.f32.mxu0 0.0
    %223 = vmatmul.mubr.f32.gmra.mrb[0].mxu0 %v156
    %v224 = vpop.f32.mrb[0].mxu0
    %v225 = vadd.f32 %v151, %v224
    %v226 = vpop.f32.mrb[0].mxu0
    %227 = vdwg.mxu0
    %v228 = vld [vmem:[%s4] sm:$0x1]
    %v230 = vlaneseq
    %v231 = vshrl.u32 %v230, 7
    %v232 = vsub.s32 0, %v231
    %v233 = vrot.slane %v228, %v232
    %v235 = vadd.f32 %v225, %v233
    %v236 = vtanh.pop %v235
    %vm237 = vcmask 523264
    %238 = vst.msk [vmem:[#allocation10] sm:$0xff] %vm237, %v236
    // Predicated region
    $region38: #{tpu_custom_call.1} parent=1 // pred_check
      _
    $region39: #{tpu_custom_call.1} parent=1 // pred_check_branch
      %240 = sbr.rel (0) target = $region41
    $region40: #{tpu_custom_call.1} parent=1 // pred_region
      %s242 = ssub.s32 128, 128
      %243 = vsyncadd [#allocation4], %s242
      %s245 = sshll.u32 [#allocation10], 4
      %s246 = int_to_ptr.vmem [resolvable:$true] %s245
      %248 = dma.vmem_to_hbm [thread:$0]  %s246, 128, %s5, [#allocation4]
    $region41: #{tpu_custom_call.1} parent=1 // pred_fallthru
      _
    // Predicated region
    $region42: #{tpu_custom_call.1} parent=1 // pred_check
      _
    $region43: #{tpu_custom_call.1} parent=1 // pred_check_branch
      %250 = sbr.rel (0) target = $region45
    $region44: #{tpu_custom_call.1} parent=1 // pred_region
      %251 = dma.done [#allocation4], 128
    $region45: #{tpu_custom_call.1} parent=1 // pred_fallthru
      _
    %252 = vsyncpa [#allocation3], 1
    %253 = vsyncpa [#allocation6], 1
    %254 = vsyncpa [#allocation9], 1
    %255 = vsyncpa [#allocation4], 1

</llo_original>
